<compile_context>
chip_gen: v5e
topology: v5e:2x2
jax: 0.10.0
libtpu: 0.0.40
codegen_flags: <defaults>
</compile_context>

<pallas_src>
from functools import partial

import numpy as np
import jax
import jax.numpy as jnp
from jax.experimental import pallas as pl
from jax.experimental.pallas import tpu as pltpu

_EULER_RANGE_DEG = [30.0, 20.0, 20.0]
_AZ_RANGE, _EL_RANGE, _CYC_RANGE = [np.pi / 180.0 * k for k in _EULER_RANGE_DEG]
_PI = np.pi


def _round_up(x, m):
    return ((x + m - 1) // m) * m


def _choose_tiling(rows, rb_max):
    """Pick (rows_per_tile, padded_rows) given batch rows (= ceil(B/128))."""
    rows = max(rows, 1)
    if rows > rb_max:
        # Multi-tile streaming case: full-size tiles, pad rows to a multiple.
        return rb_max, _round_up(rows, rb_max)
    if rows >= 64:
        # Large-ish single-tile batch: split into 2 tiles so the "parallel"
        # grid axis can shard across the two v7x TensorCores.
        rb = _round_up(-(-rows // 2), 8)
        return rb, _round_up(rows, rb)
    # Small batch: one tile equal to the full (padded) array -> block shape
    # equals full array dims, so the (8,128) divisibility rule is satisfied.
    return rows, rows


def _quat_az_ele_kernel(ang_ref, out_ref):
    # ang_ref: (3, RB, 128) f32 -- [a0, a1, a2] slabs, batch dense in
    #          sublanes (RB) x lanes (128).
    # out_ref: (4, RB, 128) f32 -- quaternion (w, x, y, z) slabs.
    a0 = ang_ref[0]
    a1 = ang_ref[1]
    a2 = ang_ref[2]

    # Half-angles (scale constants folded with the 0.5).
    h_az = (0.5 * _AZ_RANGE) * a0
    h_el = (0.5 * _EL_RANGE) * a1
    h_cr = (0.5 * _CYC_RANGE) * a2

    ca = jnp.cos(h_az)
    sa = jnp.sin(h_az)
    # elev = pi - EL_RANGE*a1  =>  cos(elev/2) = sin(h_el), sin(elev/2) = cos(h_el)
    ce = jnp.sin(h_el)
    se = jnp.cos(h_el)
    cc = jnp.cos(h_cr)
    sc = jnp.sin(h_cr)

    # q_el (ce, se, 0, 0) ⊗ q_az (ca, 0, sa, 0)  -- sparse Hamilton product.
    w = ce * ca
    x = se * ca
    y = ce * sa
    z = se * sa

    # q_cr (cc, 0, 0, sc) ⊗ (w, x, y, z)  -- sparse Hamilton product.
    out_ref[0] = cc * w - sc * z
    out_ref[1] = cc * x - sc * y
    out_ref[2] = cc * y + sc * x
    out_ref[3] = cc * z + sc * w


@partial(jax.jit, static_argnames=("rb_max",))
def quat_predictor_az_ele(angles, *, rb_max=1024):
    """angles: (B, >=3) array; returns (B, 4) float32 quaternion (w, x, y, z)."""
    angles = jnp.asarray(angles, dtype=jnp.float32)
    B = angles.shape[0]

    rb_max = max(8, _round_up(int(rb_max), 8))
    rows = _round_up(max(B, 1), 128) // 128
    rb, padded_rows = _choose_tiling(rows, rb_max)
    padded_b = padded_rows * 128

    # Component-major, then dense sublane x lane packing of the batch:
    # (B, 3) -> (3, B) -> pad -> (3, padded_rows, 128). Fused by the outer jit.
    ang_t = angles[:, :3].T
    if padded_b != B:
        ang_t = jnp.pad(ang_t, ((0, 0), (0, padded_b - B)))
    ang_t = ang_t.reshape(3, padded_rows, 128)

    cost = pl.CostEstimate(
        flops=19 * padded_b,
        transcendentals=6 * padded_b,
        bytes_accessed=(3 + 4) * 4 * padded_b,
    )

    out_t = pl.pallas_call(
        _quat_az_ele_kernel,
        out_shape=jax.ShapeDtypeStruct((4, padded_rows, 128), jnp.float32),
        grid=(padded_rows // rb,),
        in_specs=[pl.BlockSpec((3, rb, 128), lambda i: (0, i, 0))],
        out_specs=pl.BlockSpec((4, rb, 128), lambda i: (0, i, 0)),
        compiler_params=pltpu.CompilerParams(
            dimension_semantics=("parallel",)),
        cost_estimate=cost,
    )(ang_t)

    return out_t.reshape(4, padded_b)[:, :B].T  # (B, 4)


def _reference(angles):
    """Pure-JAX reference replicating the PyTorch module exactly."""
    angles = jnp.asarray(angles, dtype=jnp.float32)
    azimuth = _AZ_RANGE * angles[..., 0]
    elev = _PI - _EL_RANGE * angles[..., 1]
    cyc_rot = _CYC_RANGE * angles[..., 2]

    def ax_quat(ax, ang):
        return jnp.stack(
            [jnp.cos(ang / 2),
             ax[0] * jnp.sin(ang / 2),
             ax[1] * jnp.sin(ang / 2),
             ax[2] * jnp.sin(ang / 2)],
            axis=1,
        )

    axis = jnp.eye(3, dtype=jnp.float32)
    q_az = ax_quat(axis[1], azimuth)
    q_el = ax_quat(axis[0], elev)
    q_cr = ax_quat(axis[2], cyc_rot)

    def ham(qa, qb):
        qa0, qa1, qa2, qa3 = [qa[..., i] for i in range(4)]
        qb0, qb1, qb2, qb3 = [qb[..., i] for i in range(4)]
        return jnp.stack(
            [qa0 * qb0 - qa1 * qb1 - qa2 * qb2 - qa3 * qb3,
             qa0 * qb1 + qa1 * qb0 + qa2 * qb3 - qa3 * qb2,
             qa0 * qb2 - qa1 * qb3 + qa2 * qb0 + qa3 * qb1,
             qa0 * qb3 + qa1 * qb2 - qa2 * qb1 + qa3 * qb0],
            axis=-1,
        )

    quat = ham(q_el[:, None, :], q_az[:, None, :])
    quat = ham(q_cr[:, None, :], quat)
    return quat[:, 0, :]


if __name__ == "__main__":
    key = jax.random.PRNGKey(0)

    # Primary small check (consistent with the module's (B, 3) input).
    B = 8
    angles = jax.random.normal(key, (B, 3), dtype=jnp.float32)
    out = jax.block_until_ready(quat_predictor_az_ele(angles))
    ref = _reference(angles)
    assert out.shape == (B, 4)
    assert np.allclose(np.asarray(out), np.asarray(ref), atol=1e-5, rtol=1e-5), \
        "Pallas kernel output mismatch vs reference (B=8)"

    # Secondary check: padding + multi-step parallel grid (small rb_max).
    key2 = jax.random.PRNGKey(1)
    B2 = 1200  # rows=10, rb=8 -> padded_rows=16, grid=(2,)
    angles2 = jax.random.normal(key2, (B2, 3), dtype=jnp.float32)
    out2 = jax.block_until_ready(quat_predictor_az_ele(angles2, rb_max=8))
    ref2 = _reference(angles2)
    assert out2.shape == (B2, 4)
    assert np.allclose(np.asarray(out2), np.asarray(ref2), atol=1e-5, rtol=1e-5), \
        "Pallas kernel output mismatch vs reference (B=1200)"

    # Third check: megacore-split path (rows >= 64 -> 2-step parallel grid).
    key3 = jax.random.PRNGKey(2)
    B3 = 8197  # rows=65 -> rb=40, padded_rows=80, grid=(2,)
    angles3 = jax.random.normal(key3, (B3, 3), dtype=jnp.float32)
    out3 = jax.block_until_ready(quat_predictor_az_ele(angles3))
    ref3 = _reference(angles3)
    assert out3.shape == (B3, 4)
    assert np.allclose(np.asarray(out3), np.asarray(ref3), atol=1e-5, rtol=1e-5), \
        "Pallas kernel output mismatch vs reference (B=8197)"

    print("KERNEL_OK")
</pallas_src>

<mosaic_0001>
module attributes {stable_mosaic.version = 11 : i64} {
  func.func @_quat_az_ele_kernel(%arg0: i32, %arg1: memref<3x1x128xf32, #tpu.memory_space<vmem>>, %arg2: memref<4x1x128xf32, #tpu.memory_space<vmem>>) attributes {dimension_semantics = [#tpu.dimension_semantics<parallel>], iteration_bounds = array<i64: 1>, scalar_prefetch = 0 : i64, scratch_operands = 0 : i64, tpu.core_type = #tpu.core_type<tc>, window_params = [{transform_indices = @transform_0, window_bounds = array<i64: 3, 1, 128>}, {transform_indices = @transform_1, window_bounds = array<i64: 4, 1, 128>}]} {
    %c0 = arith.constant 0 : index
    %c0_0 = arith.constant 0 : index
    %c0_1 = arith.constant 0 : index
    %0 = vector.load %arg1[%c0, %c0_0, %c0_1] : memref<3x1x128xf32, #tpu.memory_space<vmem>>, vector<1x1x128xf32>
    %1 = vector.shape_cast %0 : vector<1x1x128xf32> to vector<1x128xf32>
    %c1 = arith.constant 1 : index
    %c0_2 = arith.constant 0 : index
    %c0_3 = arith.constant 0 : index
    %2 = vector.load %arg1[%c1, %c0_2, %c0_3] : memref<3x1x128xf32, #tpu.memory_space<vmem>>, vector<1x1x128xf32>
    %3 = vector.shape_cast %2 : vector<1x1x128xf32> to vector<1x128xf32>
    %c2 = arith.constant 2 : index
    %c0_4 = arith.constant 0 : index
    %c0_5 = arith.constant 0 : index
    %4 = vector.load %arg1[%c2, %c0_4, %c0_5] : memref<3x1x128xf32, #tpu.memory_space<vmem>>, vector<1x1x128xf32>
    %5 = vector.shape_cast %4 : vector<1x1x128xf32> to vector<1x128xf32>
    %cst = arith.constant 0.261799395 : f32
    %6 = vector.broadcast %cst : f32 to vector<1x128xf32>
    %7 = arith.mulf %6, %1 : vector<1x128xf32>
    %cst_6 = arith.constant 0.17453292 : f32
    %8 = vector.broadcast %cst_6 : f32 to vector<1x128xf32>
    %9 = arith.mulf %8, %3 : vector<1x128xf32>
    %cst_7 = arith.constant 0.17453292 : f32
    %10 = vector.broadcast %cst_7 : f32 to vector<1x128xf32>
    %11 = arith.mulf %10, %5 : vector<1x128xf32>
    %12 = math.cos %7 : vector<1x128xf32>
    %13 = math.sin %7 : vector<1x128xf32>
    %14 = math.sin %9 : vector<1x128xf32>
    %15 = math.cos %9 : vector<1x128xf32>
    %16 = math.cos %11 : vector<1x128xf32>
    %17 = math.sin %11 : vector<1x128xf32>
    %18 = arith.mulf %14, %12 : vector<1x128xf32>
    %19 = arith.mulf %15, %12 : vector<1x128xf32>
    %20 = arith.mulf %14, %13 : vector<1x128xf32>
    %21 = arith.mulf %15, %13 : vector<1x128xf32>
    %22 = arith.mulf %16, %18 : vector<1x128xf32>
    %23 = arith.mulf %17, %21 : vector<1x128xf32>
    %24 = arith.subf %22, %23 : vector<1x128xf32>
    %c0_8 = arith.constant 0 : index
    %c0_9 = arith.constant 0 : index
    %c0_10 = arith.constant 0 : index
    %25 = vector.load %arg2[%c0_8, %c0_9, %c0_10] : memref<4x1x128xf32, #tpu.memory_space<vmem>>, vector<1x1x128xf32>
    %26 = vector.shape_cast %25 : vector<1x1x128xf32> to vector<1x128xf32>
    %27 = vector.shape_cast %24 : vector<1x128xf32> to vector<1x1x128xf32>
    tpu.vector_store %arg2[%c0_8, %c0_9, %c0_10], %27 {strides = array<i32>} : memref<4x1x128xf32, #tpu.memory_space<vmem>>, vector<1x1x128xf32>,
    %28 = arith.mulf %16, %19 : vector<1x128xf32>
    %29 = arith.mulf %17, %20 : vector<1x128xf32>
    %30 = arith.subf %28, %29 : vector<1x128xf32>
    %c1_11 = arith.constant 1 : index
    %c0_12 = arith.constant 0 : index
    %c0_13 = arith.constant 0 : index
    %31 = vector.load %arg2[%c1_11, %c0_12, %c0_13] : memref<4x1x128xf32, #tpu.memory_space<vmem>>, vector<1x1x128xf32>
    %32 = vector.shape_cast %31 : vector<1x1x128xf32> to vector<1x128xf32>
    %33 = vector.shape_cast %30 : vector<1x128xf32> to vector<1x1x128xf32>
    tpu.vector_store %arg2[%c1_11, %c0_12, %c0_13], %33 {strides = array<i32>} : memref<4x1x128xf32, #tpu.memory_space<vmem>>, vector<1x1x128xf32>,
    %34 = arith.mulf %16, %20 : vector<1x128xf32>
    %35 = arith.mulf %17, %19 : vector<1x128xf32>
    %36 = arith.addf %34, %35 : vector<1x128xf32>
    %c2_14 = arith.constant 2 : index
    %c0_15 = arith.constant 0 : index
    %c0_16 = arith.constant 0 : index
    %37 = vector.load %arg2[%c2_14, %c0_15, %c0_16] : memref<4x1x128xf32, #tpu.memory_space<vmem>>, vector<1x1x128xf32>
    %38 = vector.shape_cast %37 : vector<1x1x128xf32> to vector<1x128xf32>
    %39 = vector.shape_cast %36 : vector<1x128xf32> to vector<1x1x128xf32>
    tpu.vector_store %arg2[%c2_14, %c0_15, %c0_16], %39 {strides = array<i32>} : memref<4x1x128xf32, #tpu.memory_space<vmem>>, vector<1x1x128xf32>,
    %40 = arith.mulf %16, %21 : vector<1x128xf32>
    %41 = arith.mulf %17, %18 : vector<1x128xf32>
    %42 = arith.addf %40, %41 : vector<1x128xf32>
    %c3 = arith.constant 3 : index
    %c0_17 = arith.constant 0 : index
    %c0_18 = arith.constant 0 : index
    %43 = vector.load %arg2[%c3, %c0_17, %c0_18] : memref<4x1x128xf32, #tpu.memory_space<vmem>>, vector<1x1x128xf32>
    %44 = vector.shape_cast %43 : vector<1x1x128xf32> to vector<1x128xf32>
    %45 = vector.shape_cast %42 : vector<1x128xf32> to vector<1x1x128xf32>
    tpu.vector_store %arg2[%c3, %c0_17, %c0_18], %45 {strides = array<i32>} : memref<4x1x128xf32, #tpu.memory_space<vmem>>, vector<1x1x128xf32>,
    return
  }
  func.func @transform_0(%arg0: i32) -> (i32, i32, i32) {
    %c0_i32 = arith.constant 0 : i32
    %c0_i32_0 = arith.constant 0 : i32
    %c0_i32_1 = arith.constant 0 : i32
    return %c0_i32, %arg0, %c0_i32_0 : i32, i32, i32
  }
  func.func @transform_1(%arg0: i32) -> (i32, i32, i32) {
    %c0_i32 = arith.constant 0 : i32
    %c0_i32_0 = arith.constant 0 : i32
    %c0_i32_1 = arith.constant 0 : i32
    return %c0_i32, %arg0, %c0_i32_0 : i32, i32, i32
  }
}

</mosaic_0001>

<llo_original>
// kernel: quat_predictor_az_ele.1
$region0: #{quat_predictor_az_ele.1}
  #allocation0 [shape = 'u32[]', space=smem, size = 0x4, offset = 0x4, fixed_abs, tag = 'smem constant byte address 0x4 - core index']
  #allocation1 [shape = 'u32[72,128]{1,0:T(1,128)}', space=vmem, size = 0x9000, scoped, tag = 'internal scratch']
  %s0 = inlined_call_operand.vmem [shape: f32[3,1,128], index: 0, kind: input, shape index: {}]
  %s1 = inlined_call_operand.vmem [shape: f32[4,1,128], index: 1, kind: output, shape index: {}]
  %s2 = sld [smem:[#allocation0]]
  $region14: #{quat_predictor_az_ele.1} parent=0
    _
  %s4 = ssub.s32 1, %s2
  %s5 = scalar_select 0, %s4, %s2
  // Predicated region
  $region2: #{quat_predictor_az_ele.1} parent=0 // pred_check
    _
  $region3: #{quat_predictor_az_ele.1} parent=0 // pred_check_branch
    %7 = sbr.rel (0) target = $region5
  $region4: #{quat_predictor_az_ele.1} parent=0 // pred_region
    _
  $region5: #{quat_predictor_az_ele.1} parent=0 // pred_fallthru
    _
  %v8 = vld [vmem:[%s0] sm:$0x1]
  %s9 = scalar_lea.vmem %s0, 1
  %v10 = vld [vmem:[%s9] sm:$0x1]
  %s11 = scalar_lea.vmem %s0, 2
  %v12 = vld [vmem:[%s11] sm:$0x1]
  %v13 = vmul.f32 %v8, 0.2617994
  %v14 = vmul.f32 %v10, 0.17453292
  %v15 = vmul.f32 %v12, 0.17453292
  %v16 = vand.u32 2147483647, %v13
  %vm17 = vcmp.le.f32.partialorder %v16, 0.7853982
  %vm18 = vcmp.lt.s32.totalorder %v13, 0
  %v19 = vand.u32 %v13, 2139095040
  %v20 = vshrl.u32 %v19, 23
  %v21 = vsub.s32 %v20, 127
  %v22 = vand.u32 2147483647, %v13
  %v23 = vand.u32 %v22, 8388607
  %v24 = vor.u32 %v23, 8388608
  %v25 = vsub.s32 0, %v24
  %v26 = vadd.s32 %v21, 1
  %vm27 = vcmp.gt.s32.totalorder %v26, 0
  %v28 = vsel %vm27, %v26, 0
  %v29 = vshrl.u32 %v28, 5
  %v30 = vand.u32 %v28, 31
  %v31 = vsub.s32 32, %v30
  %v32 = vshrl.u32 683565275, %v31
  %v33 = vshll.u32 683565275, %v30
  %v34 = vshrl.u32 2475754826, %v31
  %v35 = vor.u32 %v33, %v34
  %v36 = vshll.u32 2475754826, %v30
  %v37 = vshrl.u32 2131351028, %v31
  %v38 = vor.u32 %v36, %v37
  %v39 = vshll.u32 2131351028, %v30
  %v40 = vshrl.u32 2102212464, %v31
  %v41 = vor.u32 %v39, %v40
  %v42 = vshll.u32 2102212464, %v30
  %v43 = vshrl.u32 920167782, %v31
  %v44 = vor.u32 %v42, %v43
  %v45 = vshll.u32 920167782, %v30
  %v46 = vshrl.u32 1326507024, %v31
  %v47 = vor.u32 %v45, %v46
  %vm48 = vcmp.lt.s32.totalorder %v29, 1
  %vm49 = vcmp.lt.s32.totalorder %v29, 2
  %vm50 = vcmp.lt.s32.totalorder %v29, 3
  %vm51 = vcmp.lt.s32.totalorder %v29, 4
  %v52 = vsel %vm48, %v32, %v35
  %v53 = vsel %vm51, %v41, 2102212464
  %v54 = vsel %vm50, %v38, %v53
  %v55 = vsel %vm49, %v52, %v54
  %v56 = vsel %vm48, %v35, %v38
  %v57 = vsel %vm51, %v44, 920167782
  %v58 = vsel %vm50, %v41, %v57
  %v59 = vsel %vm49, %v56, %v58
  %v60 = vsel %vm48, %v38, %v41
  %v61 = vsel %vm51, %v47, 1326507024
  %v62 = vsel %vm50, %v44, %v61
  %v63 = vsel %vm49, %v60, %v62
  %v64 = vshll.u32 %v24, 8
  %v65 = vand.u32 %v64, 65535
  %v66 = vshrl.u32 %v64, 16
  %v67 = vand.u32 %v63, 65535
  %v68 = vshrl.u32 %v63, 16
  %v69 = vmul.u32 %v65, %v67
  %v70 = vmul.u32 %v65, %v68
  %v71 = vmul.u32 %v66, %v67
  %v72 = vmul.u32 %v66, %v68
  %v73 = vshll.u32 %v70, 16
  %v74 = vshrl.u32 %v70, 16
  %v75 = vshll.u32 %v71, 16
  %v76 = vshrl.u32 %v71, 16
  %vm77 = vc.u32 %v69, %v73
  %v78 = vsel %vm77, 1, 0
  %v79 = vadd.s32 %v69, %v73
  %v80 = vadd.s32 %v72, %v78
  %vm81 = vc.u32 %v79, %v75
  %v82 = vsel %vm81, 1, 0
  %v83 = vadd.s32 %v79, %v75
  %v84 = vadd.s32 %v80, %v82
  %v85 = vadd.s32 %v84, %v74
  %v86 = vadd.s32 %v85, %v76
  %v87 = vand.u32 %v64, 65535
  %v88 = vshrl.u32 %v64, 16
  %v89 = vand.u32 %v59, 65535
  %v90 = vshrl.u32 %v59, 16
  %v91 = vmul.u32 %v87, %v89
  %v92 = vmul.u32 %v87, %v90
  %v93 = vmul.u32 %v88, %v89
  %v94 = vmul.u32 %v88, %v90
  %v95 = vshll.u32 %v92, 16
  %v96 = vshrl.u32 %v92, 16
  %v97 = vshll.u32 %v93, 16
  %v98 = vshrl.u32 %v93, 16
  %vm99 = vc.u32 %v91, %v95
  %v100 = vsel %vm99, 1, 0
  %v101 = vadd.s32 %v91, %v95
  %v102 = vadd.s32 %v94, %v100
  %vm103 = vc.u32 %v101, %v97
  %v104 = vsel %vm103, 1, 0
  %v105 = vadd.s32 %v101, %v97
  %v106 = vadd.s32 %v102, %v104
  %v107 = vadd.s32 %v106, %v96
  %v108 = vadd.s32 %v107, %v98
  %v109 = vmul.u32 %v64, %v55
  %v110 = vadd.s32 %v86, %v105
  %vm111 = vc.u32 %v86, %v105
  %v112 = vadd.s32 %v108, 1
  %v113 = vsel %vm111, %v112, %v108
  %v114 = vadd.s32 %v109, %v113
  %v115 = vadd.s32 %v114, 536870912
  %v116 = vshrl.u32 %v115, 30
  %v117 = vshll.u32 %v116, 30
  %v118 = vsub.s32 %v114, %v117
  %vm119 = vcmp.lt.s32.totalorder %v118, 0
  %v120 = vsub.s32 0, %v118
  %v121 = vsel %vm119, %v120, %v118
  %v122 = vclz %v121
  %v123 = vsub.s32 %v122, 2
  %vm124 = vcmp.gt.s32.totalorder 0, %v123
  %v125 = vsel %vm124, 0, %v123
  %v126 = vsub.s32 32, %v125
  %v127 = vshll.u32 %v118, %v125
  %v128 = vshrl.u32 %v110, %v126
  %v129 = vor.u32 %v127, %v128
  %v130 = vsub.s32 4294967266, %v125
  %v131 = vadd.s32 %v130, 127
  %v132 = vshll.u32 %v131, 23
  %v133 = vor.u32 4788187, %v132
  %v134 = vand.u32 2147483647, %v133
  %v136 = vcvt.s32.f32 %v129
  %v137 = vmul.f32 %v136, %v134
  %v138 = vxor.u32 %v137, 2147483648
  %v139 = vsel %vm18, %v138, %v137
  %v140 = vsub.s32 4, %v116
  %v141 = vsel %vm18, %v140, %v116
  %v142 = vsel %vm17, %v13, %v139
  %v143 = vsel %vm17, 0, %v141
  %v144 = vmul.f32 %v142, %v142
  %v145 = vmul.f32 %v144, -0.001358992
  %v146 = vadd.f32 %v145, 0.041655596
  %v147 = vmul.f32 %v144, %v146
  %v148 = vadd.f32 %v147, -0.4999988
  %v149 = vmul.f32 %v144, %v148
  %v150 = vadd.f32 1.0, %v149
  %v151 = vmul.f32 %v142, %v142
  %v152 = vmul.f32 %v151, -0.00019511016
  %v153 = vadd.f32 %v152, 0.008332121
  %v154 = vmul.f32 %v151, %v153
  %v155 = vadd.f32 %v154, -0.16666654
  %v156 = vmul.f32 %v151, %v155
  %v157 = vadd.f32 %v156, 1.0
  %v158 = vmul.f32 %v157, %v142
  %vm159 = vweird.f32 %v13
  %v160 = vand.u32 %v143, 3
  %vm161 = vcmp.lt.s32.totalorder %v160, 2
  %vm162 = vcmp.eq.s32.totalorder %v160, 0
  %v163 = vxor.u32 %v158, 2147483648
  %v164 = vsel %vm162, %v150, %v163
  %vm165 = vcmp.eq.s32.totalorder %v160, 2
  %v166 = vxor.u32 %v150, 2147483648
  %v167 = vsel %vm165, %v166, %v158
  %v168 = vsel %vm161, %v164, %v167
  %v169 = vsel %vm159, nan, %v168
  %v170 = vand.u32 2147483647, %v13
  %vm171 = vcmp.le.f32.partialorder %v170, 0.7853982
  %vm172 = vcmp.lt.s32.totalorder %v13, 0
  %v173 = vand.u32 %v13, 2139095040
  %v174 = vshrl.u32 %v173, 23
  %v175 = vsub.s32 %v174, 127
  %v176 = vand.u32 2147483647, %v13
  %v177 = vand.u32 %v176, 8388607
  %v178 = vor.u32 %v177, 8388608
  %v179 = vsub.s32 0, %v178
  %v180 = vadd.s32 %v175, 1
  %vm181 = vcmp.gt.s32.totalorder %v180, 0
  %v182 = vsel %vm181, %v180, 0
  %v183 = vshrl.u32 %v182, 5
  %v184 = vand.u32 %v182, 31
  %v185 = vsub.s32 32, %v184
  %v186 = vshrl.u32 683565275, %v185
  %v187 = vshll.u32 683565275, %v184
  %v188 = vshrl.u32 2475754826, %v185
  %v189 = vor.u32 %v187, %v188
  %v190 = vshll.u32 2475754826, %v184
  %v191 = vshrl.u32 2131351028, %v185
  %v192 = vor.u32 %v190, %v191
  %v193 = vshll.u32 2131351028, %v184
  %v194 = vshrl.u32 2102212464, %v185
  %v195 = vor.u32 %v193, %v194
  %v196 = vshll.u32 2102212464, %v184
  %v197 = vshrl.u32 920167782, %v185
  %v198 = vor.u32 %v196, %v197
  %v199 = vshll.u32 920167782, %v184
  %v200 = vshrl.u32 1326507024, %v185
  %v201 = vor.u32 %v199, %v200
  %vm202 = vcmp.lt.s32.totalorder %v183, 1
  %vm203 = vcmp.lt.s32.totalorder %v183, 2
  %vm204 = vcmp.lt.s32.totalorder %v183, 3
  %vm205 = vcmp.lt.s32.totalorder %v183, 4
  %v206 = vsel %vm202, %v186, %v189
  %v207 = vsel %vm205, %v195, 2102212464
  %v208 = vsel %vm204, %v192, %v207
  %v209 = vsel %vm203, %v206, %v208
  %v210 = vsel %vm202, %v189, %v192
  %v211 = vsel %vm205, %v198, 920167782
  %v212 = vsel %vm204, %v195, %v211
  %v213 = vsel %vm203, %v210, %v212
  %v214 = vsel %vm202, %v192, %v195
  %v215 = vsel %vm205, %v201, 1326507024
  %v216 = vsel %vm204, %v198, %v215
  %v217 = vsel %vm203, %v214, %v216
  %v218 = vshll.u32 %v178, 8
  %v219 = vand.u32 %v218, 65535
  %v220 = vshrl.u32 %v218, 16
  %v221 = vand.u32 %v217, 65535
  %v222 = vshrl.u32 %v217, 16
  %v223 = vmul.u32 %v219, %v221
  %v224 = vmul.u32 %v219, %v222
  %v225 = vmul.u32 %v220, %v221
  %v226 = vmul.u32 %v220, %v222
  %v227 = vshll.u32 %v224, 16
  %v228 = vshrl.u32 %v224, 16
  %v229 = vshll.u32 %v225, 16
  %v230 = vshrl.u32 %v225, 16
  %vm231 = vc.u32 %v223, %v227
  %v232 = vsel %vm231, 1, 0
  %v233 = vadd.s32 %v223, %v227
  %v234 = vadd.s32 %v226, %v232
  %vm235 = vc.u32 %v233, %v229
  %v236 = vsel %vm235, 1, 0
  %v237 = vadd.s32 %v233, %v229
  %v238 = vadd.s32 %v234, %v236
  %v239 = vadd.s32 %v238, %v228
  %v240 = vadd.s32 %v239, %v230
  %v241 = vand.u32 %v218, 65535
  %v242 = vshrl.u32 %v218, 16
  %v243 = vand.u32 %v213, 65535
  %v244 = vshrl.u32 %v213, 16
  %v245 = vmul.u32 %v241, %v243
  %v246 = vmul.u32 %v241, %v244
  %v247 = vmul.u32 %v242, %v243
  %v248 = vmul.u32 %v242, %v244
  %v249 = vshll.u32 %v246, 16
  %v250 = vshrl.u32 %v246, 16
  %v251 = vshll.u32 %v247, 16
  %v252 = vshrl.u32 %v247, 16
  %vm253 = vc.u32 %v245, %v249
  %v254 = vsel %vm253, 1, 0
  %v255 = vadd.s32 %v245, %v249
  %v256 = vadd.s32 %v248, %v254
  %vm257 = vc.u32 %v255, %v251
  %v258 = vsel %vm257, 1, 0
  %v259 = vadd.s32 %v255, %v251
  %v260 = vadd.s32 %v256, %v258
  %v261 = vadd.s32 %v260, %v250
  %v262 = vadd.s32 %v261, %v252
  %v263 = vmul.u32 %v218, %v209
  %v264 = vadd.s32 %v240, %v259
  %vm265 = vc.u32 %v240, %v259
  %v266 = vadd.s32 %v262, 1
  %v267 = vsel %vm265, %v266, %v262
  %v268 = vadd.s32 %v263, %v267
  %v269 = vadd.s32 %v268, 536870912
  %v270 = vshrl.u32 %v269, 30
  %v271 = vshll.u32 %v270, 30
  %v272 = vsub.s32 %v268, %v271
  %vm273 = vcmp.lt.s32.totalorder %v272, 0
  %v274 = vsub.s32 0, %v272
  %v275 = vsel %vm273, %v274, %v272
  %v276 = vclz %v275
  %v277 = vsub.s32 %v276, 2
  %vm278 = vcmp.gt.s32.totalorder 0, %v277
  %v279 = vsel %vm278, 0, %v277
  %v280 = vsub.s32 32, %v279
  %v281 = vshll.u32 %v272, %v279
  %v282 = vshrl.u32 %v264, %v280
  %v283 = vor.u32 %v281, %v282
  %v284 = vsub.s32 4294967266, %v279
  %v285 = vadd.s32 %v284, 127
  %v286 = vshll.u32 %v285, 23
  %v287 = vor.u32 4788187, %v286
  %v288 = vand.u32 2147483647, %v287
  %v290 = vcvt.s32.f32 %v283
  %v291 = vmul.f32 %v290, %v288
  %v292 = vxor.u32 %v291, 2147483648
  %v293 = vsel %vm172, %v292, %v291
  %v294 = vsub.s32 4, %v270
  %v295 = vsel %vm172, %v294, %v270
  %v296 = vsel %vm171, %v13, %v293
  %v297 = vsel %vm171, 0, %v295
  %v298 = vmul.f32 %v296, %v296
  %v299 = vmul.f32 %v298, -0.001358992
  %v300 = vadd.f32 %v299, 0.041655596
  %v301 = vmul.f32 %v298, %v300
  %v302 = vadd.f32 %v301, -0.4999988
  %v303 = vmul.f32 %v298, %v302
  %v304 = vadd.f32 1.0, %v303
  %v305 = vmul.f32 %v296, %v296
  %v306 = vmul.f32 %v305, -0.00019511016
  %v307 = vadd.f32 %v306, 0.008332121
  %v308 = vmul.f32 %v305, %v307
  %v309 = vadd.f32 %v308, -0.16666654
  %v310 = vmul.f32 %v305, %v309
  %v311 = vadd.f32 %v310, 1.0
  %v312 = vmul.f32 %v311, %v296
  %vm313 = vweird.f32 %v13
  %v314 = vadd.s32 %v297, 3
  %v315 = vand.u32 %v314, 3
  %vm316 = vcmp.lt.s32.totalorder %v315, 2
  %vm317 = vcmp.eq.s32.totalorder %v315, 0
  %v318 = vxor.u32 %v312, 2147483648
  %v319 = vsel %vm317, %v304, %v318
  %vm320 = vcmp.eq.s32.totalorder %v315, 2
  %v321 = vxor.u32 %v304, 2147483648
  %v322 = vsel %vm320, %v321, %v312
  %v323 = vsel %vm316, %v319, %v322
  %v324 = vsel %vm313, nan, %v323
  %v325 = vand.u32 2147483647, %v14
  %vm326 = vcmp.le.f32.partialorder %v325, 0.7853982
  %vm327 = vcmp.lt.s32.totalorder %v14, 0
  %v328 = vand.u32 %v14, 2139095040
  %v329 = vshrl.u32 %v328, 23
  %v330 = vsub.s32 %v329, 127
  %v331 = vand.u32 2147483647, %v14
  %v332 = vand.u32 %v331, 8388607
  %v333 = vor.u32 %v332, 8388608
  %v334 = vsub.s32 0, %v333
  %v335 = vadd.s32 %v330, 1
  %vm336 = vcmp.gt.s32.totalorder %v335, 0
  %v337 = vsel %vm336, %v335, 0
  %v338 = vshrl.u32 %v337, 5
  %v339 = vand.u32 %v337, 31
  %v340 = vsub.s32 32, %v339
  %v341 = vshrl.u32 683565275, %v340
  %v342 = vshll.u32 683565275, %v339
  %v343 = vshrl.u32 2475754826, %v340
  %v344 = vor.u32 %v342, %v343
  %v345 = vshll.u32 2475754826, %v339
  %v346 = vshrl.u32 2131351028, %v340
  %v347 = vor.u32 %v345, %v346
  %v348 = vshll.u32 2131351028, %v339
  %v349 = vshrl.u32 2102212464, %v340
  %v350 = vor.u32 %v348, %v349
  %v351 = vshll.u32 2102212464, %v339
  %v352 = vshrl.u32 920167782, %v340
  %v353 = vor.u32 %v351, %v352
  %v354 = vshll.u32 920167782, %v339
  %v355 = vshrl.u32 1326507024, %v340
  %v356 = vor.u32 %v354, %v355
  %vm357 = vcmp.lt.s32.totalorder %v338, 1
  %vm358 = vcmp.lt.s32.totalorder %v338, 2
  %vm359 = vcmp.lt.s32.totalorder %v338, 3
  %vm360 = vcmp.lt.s32.totalorder %v338, 4
  %v361 = vsel %vm357, %v341, %v344
  %v362 = vsel %vm360, %v350, 2102212464
  %v363 = vsel %vm359, %v347, %v362
  %v364 = vsel %vm358, %v361, %v363
  %v365 = vsel %vm357, %v344, %v347
  %v366 = vsel %vm360, %v353, 920167782
  %v367 = vsel %vm359, %v350, %v366
  %v368 = vsel %vm358, %v365, %v367
  %v369 = vsel %vm357, %v347, %v350
  %v370 = vsel %vm360, %v356, 1326507024
  %v371 = vsel %vm359, %v353, %v370
  %v372 = vsel %vm358, %v369, %v371
  %v373 = vshll.u32 %v333, 8
  %v374 = vand.u32 %v373, 65535
  %v375 = vshrl.u32 %v373, 16
  %v376 = vand.u32 %v372, 65535
  %v377 = vshrl.u32 %v372, 16
  %v378 = vmul.u32 %v374, %v376
  %v379 = vmul.u32 %v374, %v377
  %v380 = vmul.u32 %v375, %v376
  %v381 = vmul.u32 %v375, %v377
  %v382 = vshll.u32 %v379, 16
  %v383 = vshrl.u32 %v379, 16
  %v384 = vshll.u32 %v380, 16
  %v385 = vshrl.u32 %v380, 16
  %vm386 = vc.u32 %v378, %v382
  %v387 = vsel %vm386, 1, 0
  %v388 = vadd.s32 %v378, %v382
  %v389 = vadd.s32 %v381, %v387
  %vm390 = vc.u32 %v388, %v384
  %v391 = vsel %vm390, 1, 0
  %v392 = vadd.s32 %v388, %v384
  %v393 = vadd.s32 %v389, %v391
  %v394 = vadd.s32 %v393, %v383
  %v395 = vadd.s32 %v394, %v385
  %v396 = vand.u32 %v373, 65535
  %v397 = vshrl.u32 %v373, 16
  %v398 = vand.u32 %v368, 65535
  %v399 = vshrl.u32 %v368, 16
  %v400 = vmul.u32 %v396, %v398
  %v401 = vmul.u32 %v396, %v399
  %v402 = vmul.u32 %v397, %v398
  %v403 = vmul.u32 %v397, %v399
  %v404 = vshll.u32 %v401, 16
  %v405 = vshrl.u32 %v401, 16
  %v406 = vshll.u32 %v402, 16
  %v407 = vshrl.u32 %v402, 16
  %vm408 = vc.u32 %v400, %v404
  %v409 = vsel %vm408, 1, 0
  %v410 = vadd.s32 %v400, %v404
  %v411 = vadd.s32 %v403, %v409
  %vm412 = vc.u32 %v410, %v406
  %v413 = vsel %vm412, 1, 0
  %v414 = vadd.s32 %v410, %v406
  %v415 = vadd.s32 %v411, %v413
  %v416 = vadd.s32 %v415, %v405
  %v417 = vadd.s32 %v416, %v407
  %v418 = vmul.u32 %v373, %v364
  %v419 = vadd.s32 %v395, %v414
  %vm420 = vc.u32 %v395, %v414
  %v421 = vadd.s32 %v417, 1
  %v422 = vsel %vm420, %v421, %v417
  %v423 = vadd.s32 %v418, %v422
  %v424 = vadd.s32 %v423, 536870912
  %v425 = vshrl.u32 %v424, 30
  %v426 = vshll.u32 %v425, 30
  %v427 = vsub.s32 %v423, %v426
  %vm428 = vcmp.lt.s32.totalorder %v427, 0
  %v429 = vsub.s32 0, %v427
  %v430 = vsel %vm428, %v429, %v427
  %v431 = vclz %v430
  %v432 = vsub.s32 %v431, 2
  %vm433 = vcmp.gt.s32.totalorder 0, %v432
  %v434 = vsel %vm433, 0, %v432
  %v435 = vsub.s32 32, %v434
  %v436 = vshll.u32 %v427, %v434
  %v437 = vshrl.u32 %v419, %v435
  %v438 = vor.u32 %v436, %v437
  %v439 = vsub.s32 4294967266, %v434
  %v440 = vadd.s32 %v439, 127
  %v441 = vshll.u32 %v440, 23
  %v442 = vor.u32 4788187, %v441
  %v443 = vand.u32 2147483647, %v442
  %v445 = vcvt.s32.f32 %v438
  %v446 = vmul.f32 %v445, %v443
  %v447 = vxor.u32 %v446, 2147483648
  %v448 = vsel %vm327, %v447, %v446
  %v449 = vsub.s32 4, %v425
  %v450 = vsel %vm327, %v449, %v425
  %v451 = vsel %vm326, %v14, %v448
  %v452 = vsel %vm326, 0, %v450
  %v453 = vmul.f32 %v451, %v451
  %v454 = vmul.f32 %v453, -0.001358992
  %v455 = vadd.f32 %v454, 0.041655596
  %v456 = vmul.f32 %v453, %v455
  %v457 = vadd.f32 %v456, -0.4999988
  %v458 = vmul.f32 %v453, %v457
  %v459 = vadd.f32 1.0, %v458
  %v460 = vmul.f32 %v451, %v451
  %v461 = vmul.f32 %v460, -0.00019511016
  %v462 = vadd.f32 %v461, 0.008332121
  %v463 = vmul.f32 %v460, %v462
  %v464 = vadd.f32 %v463, -0.16666654
  %v465 = vmul.f32 %v460, %v464
  %v466 = vadd.f32 %v465, 1.0
  %v467 = vmul.f32 %v466, %v451
  %vm468 = vweird.f32 %v14
  %v469 = vadd.s32 %v452, 3
  %v470 = vand.u32 %v469, 3
  %vm471 = vcmp.lt.s32.totalorder %v470, 2
  %vm472 = vcmp.eq.s32.totalorder %v470, 0
  %v473 = vxor.u32 %v467, 2147483648
  %v474 = vsel %vm472, %v459, %v473
  %vm475 = vcmp.eq.s32.totalorder %v470, 2
  %v476 = vxor.u32 %v459, 2147483648
  %v477 = vsel %vm475, %v476, %v467
  %v478 = vsel %vm471, %v474, %v477
  %v479 = vsel %vm468, nan, %v478
  %v480 = vand.u32 2147483647, %v14
  %vm481 = vcmp.le.f32.partialorder %v480, 0.7853982
  %vm482 = vcmp.lt.s32.totalorder %v14, 0
  %v483 = vand.u32 %v14, 2139095040
  %v484 = vshrl.u32 %v483, 23
  %v485 = vsub.s32 %v484, 127
  %v486 = vand.u32 2147483647, %v14
  %v487 = vand.u32 %v486, 8388607
  %v488 = vor.u32 %v487, 8388608
  %v489 = vsub.s32 0, %v488
  %v490 = vadd.s32 %v485, 1
  %vm491 = vcmp.gt.s32.totalorder %v490, 0
  %v492 = vsel %vm491, %v490, 0
  %v493 = vshrl.u32 %v492, 5
  %v494 = vand.u32 %v492, 31
  %v495 = vsub.s32 32, %v494
  %v496 = vshrl.u32 683565275, %v495
  %v497 = vshll.u32 683565275, %v494
  %v498 = vshrl.u32 2475754826, %v495
  %v499 = vor.u32 %v497, %v498
  %v500 = vshll.u32 2475754826, %v494
  %v501 = vshrl.u32 2131351028, %v495
  %v502 = vor.u32 %v500, %v501
  %v503 = vshll.u32 2131351028, %v494
  %v504 = vshrl.u32 2102212464, %v495
  %v505 = vor.u32 %v503, %v504
  %v506 = vshll.u32 2102212464, %v494
  %v507 = vshrl.u32 920167782, %v495
  %v508 = vor.u32 %v506, %v507
  %v509 = vshll.u32 920167782, %v494
  %v510 = vshrl.u32 1326507024, %v495
  %v511 = vor.u32 %v509, %v510
  %vm512 = vcmp.lt.s32.totalorder %v493, 1
  %vm513 = vcmp.lt.s32.totalorder %v493, 2
  %vm514 = vcmp.lt.s32.totalorder %v493, 3
  %vm515 = vcmp.lt.s32.totalorder %v493, 4
  %v516 = vsel %vm512, %v496, %v499
  %v517 = vsel %vm515, %v505, 2102212464
  %v518 = vsel %vm514, %v502, %v517
  %v519 = vsel %vm513, %v516, %v518
  %v520 = vsel %vm512, %v499, %v502
  %v521 = vsel %vm515, %v508, 920167782
  %v522 = vsel %vm514, %v505, %v521
  %v523 = vsel %vm513, %v520, %v522
  %v524 = vsel %vm512, %v502, %v505
  %v525 = vsel %vm515, %v511, 1326507024
  %v526 = vsel %vm514, %v508, %v525
  %v527 = vsel %vm513, %v524, %v526
  %v528 = vshll.u32 %v488, 8
  %v529 = vand.u32 %v528, 65535
  %v530 = vshrl.u32 %v528, 16
  %v531 = vand.u32 %v527, 65535
  %v532 = vshrl.u32 %v527, 16
  %v533 = vmul.u32 %v529, %v531
  %v534 = vmul.u32 %v529, %v532
  %v535 = vmul.u32 %v530, %v531
  %v536 = vmul.u32 %v530, %v532
  %v537 = vshll.u32 %v534, 16
  %v538 = vshrl.u32 %v534, 16
  %v539 = vshll.u32 %v535, 16
  %v540 = vshrl.u32 %v535, 16
  %vm541 = vc.u32 %v533, %v537
  %v542 = vsel %vm541, 1, 0
  %v543 = vadd.s32 %v533, %v537
  %v544 = vadd.s32 %v536, %v542
  %vm545 = vc.u32 %v543, %v539
  %v546 = vsel %vm545, 1, 0
  %v547 = vadd.s32 %v543, %v539
  %v548 = vadd.s32 %v544, %v546
  %v549 = vadd.s32 %v548, %v538
  %v550 = vadd.s32 %v549, %v540
  %v551 = vand.u32 %v528, 65535
  %v552 = vshrl.u32 %v528, 16
  %v553 = vand.u32 %v523, 65535
  %v554 = vshrl.u32 %v523, 16
  %v555 = vmul.u32 %v551, %v553
  %v556 = vmul.u32 %v551, %v554
  %v557 = vmul.u32 %v552, %v553
  %v558 = vmul.u32 %v552, %v554
  %v559 = vshll.u32 %v556, 16
  %v560 = vshrl.u32 %v556, 16
  %v561 = vshll.u32 %v557, 16
  %v562 = vshrl.u32 %v557, 16
  %vm563 = vc.u32 %v555, %v559
  %v564 = vsel %vm563, 1, 0
  %v565 = vadd.s32 %v555, %v559
  %v566 = vadd.s32 %v558, %v564
  %vm567 = vc.u32 %v565, %v561
  %v568 = vsel %vm567, 1, 0
  %v569 = vadd.s32 %v565, %v561
  %v570 = vadd.s32 %v566, %v568
  %v571 = vadd.s32 %v570, %v560
  %v572 = vadd.s32 %v571, %v562
  %v573 = vmul.u32 %v528, %v519
  %v574 = vadd.s32 %v550, %v569
  %vm575 = vc.u32 %v550, %v569
  %v576 = vadd.s32 %v572, 1
  %v577 = vsel %vm575, %v576, %v572
  %v578 = vadd.s32 %v573, %v577
  %v579 = vadd.s32 %v578, 536870912
  %v580 = vshrl.u32 %v579, 30
  %v581 = vshll.u32 %v580, 30
  %v582 = vsub.s32 %v578, %v581
  %vm583 = vcmp.lt.s32.totalorder %v582, 0
  %v584 = vsub.s32 0, %v582
  %v585 = vsel %vm583, %v584, %v582
  %v586 = vclz %v585
  %v587 = vsub.s32 %v586, 2
  %vm588 = vcmp.gt.s32.totalorder 0, %v587
  %v589 = vsel %vm588, 0, %v587
  %v590 = vsub.s32 32, %v589
  %v591 = vshll.u32 %v582, %v589
  %v592 = vshrl.u32 %v574, %v590
  %v593 = vor.u32 %v591, %v592
  %v594 = vsub.s32 4294967266, %v589
  %v595 = vadd.s32 %v594, 127
  %v596 = vshll.u32 %v595, 23
  %v597 = vor.u32 4788187, %v596
  %v598 = vand.u32 2147483647, %v597
  %v600 = vcvt.s32.f32 %v593
  %v601 = vmul.f32 %v600, %v598
  %v602 = vxor.u32 %v601, 2147483648
  %v603 = vsel %vm482, %v602, %v601
  %v604 = vsub.s32 4, %v580
  %v605 = vsel %vm482, %v604, %v580
  %v606 = vsel %vm481, %v14, %v603
  %v607 = vsel %vm481, 0, %v605
  %v608 = vmul.f32 %v606, %v606
  %v609 = vmul.f32 %v608, -0.001358992
  %v610 = vadd.f32 %v609, 0.041655596
  %v611 = vmul.f32 %v608, %v610
  %v612 = vadd.f32 %v611, -0.4999988
  %v613 = vmul.f32 %v608, %v612
  %v614 = vadd.f32 1.0, %v613
  %v615 = vmul.f32 %v606, %v606
  %v616 = vmul.f32 %v615, -0.00019511016
  %v617 = vadd.f32 %v616, 0.008332121
  %v618 = vmul.f32 %v615, %v617
  %v619 = vadd.f32 %v618, -0.16666654
  %v620 = vmul.f32 %v615, %v619
  %v621 = vadd.f32 %v620, 1.0
  %v622 = vmul.f32 %v621, %v606
  %vm623 = vweird.f32 %v14
  %v624 = vand.u32 %v607, 3
  %vm625 = vcmp.lt.s32.totalorder %v624, 2
  %vm626 = vcmp.eq.s32.totalorder %v624, 0
  %v627 = vxor.u32 %v622, 2147483648
  %v628 = vsel %vm626, %v614, %v627
  %vm629 = vcmp.eq.s32.totalorder %v624, 2
  %v630 = vxor.u32 %v614, 2147483648
  %v631 = vsel %vm629, %v630, %v622
  %v632 = vsel %vm625, %v628, %v631
  %v633 = vsel %vm623, nan, %v632
  %v634 = vand.u32 2147483647, %v15
  %vm635 = vcmp.le.f32.partialorder %v634, 0.7853982
  %vm636 = vcmp.lt.s32.totalorder %v15, 0
  %v637 = vand.u32 %v15, 2139095040
  %v638 = vshrl.u32 %v637, 23
  %v639 = vsub.s32 %v638, 127
  %v640 = vand.u32 2147483647, %v15
  %v641 = vand.u32 %v640, 8388607
  %v642 = vor.u32 %v641, 8388608
  %v643 = vsub.s32 0, %v642
  %v644 = vadd.s32 %v639, 1
  %vm645 = vcmp.gt.s32.totalorder %v644, 0
  %v646 = vsel %vm645, %v644, 0
  %v647 = vshrl.u32 %v646, 5
  %v648 = vand.u32 %v646, 31
  %v649 = vsub.s32 32, %v648
  %v650 = vshrl.u32 683565275, %v649
  %v651 = vshll.u32 683565275, %v648
  %v652 = vshrl.u32 2475754826, %v649
  %v653 = vor.u32 %v651, %v652
  %v654 = vshll.u32 2475754826, %v648
  %v655 = vshrl.u32 2131351028, %v649
  %v656 = vor.u32 %v654, %v655
  %v657 = vshll.u32 2131351028, %v648
  %v658 = vshrl.u32 2102212464, %v649
  %v659 = vor.u32 %v657, %v658
  %v660 = vshll.u32 2102212464, %v648
  %v661 = vshrl.u32 920167782, %v649
  %v662 = vor.u32 %v660, %v661
  %v663 = vshll.u32 920167782, %v648
  %v664 = vshrl.u32 1326507024, %v649
  %v665 = vor.u32 %v663, %v664
  %vm666 = vcmp.lt.s32.totalorder %v647, 1
  %vm667 = vcmp.lt.s32.totalorder %v647, 2
  %vm668 = vcmp.lt.s32.totalorder %v647, 3
  %vm669 = vcmp.lt.s32.totalorder %v647, 4
  %v670 = vsel %vm666, %v650, %v653
  %v671 = vsel %vm669, %v659, 2102212464
  %v672 = vsel %vm668, %v656, %v671
  %v673 = vsel %vm667, %v670, %v672
  %v674 = vsel %vm666, %v653, %v656
  %v675 = vsel %vm669, %v662, 920167782
  %v676 = vsel %vm668, %v659, %v675
  %v677 = vsel %vm667, %v674, %v676
  %v678 = vsel %vm666, %v656, %v659
  %v679 = vsel %vm669, %v665, 1326507024
  %v680 = vsel %vm668, %v662, %v679
  %v681 = vsel %vm667, %v678, %v680
  %v682 = vshll.u32 %v642, 8
  %v683 = vand.u32 %v682, 65535
  %v684 = vshrl.u32 %v682, 16
  %v685 = vand.u32 %v681, 65535
  %v686 = vshrl.u32 %v681, 16
  %v687 = vmul.u32 %v683, %v685
  %v688 = vmul.u32 %v683, %v686
  %v689 = vmul.u32 %v684, %v685
  %v690 = vmul.u32 %v684, %v686
  %v691 = vshll.u32 %v688, 16
  %v692 = vshrl.u32 %v688, 16
  %v693 = vshll.u32 %v689, 16
  %v694 = vshrl.u32 %v689, 16
  %vm695 = vc.u32 %v687, %v691
  %v696 = vsel %vm695, 1, 0
  %v697 = vadd.s32 %v687, %v691
  %v698 = vadd.s32 %v690, %v696
  %vm699 = vc.u32 %v697, %v693
  %v700 = vsel %vm699, 1, 0
  %v701 = vadd.s32 %v697, %v693
  %v702 = vadd.s32 %v698, %v700
  %v703 = vadd.s32 %v702, %v692
  %v704 = vadd.s32 %v703, %v694
  %v705 = vand.u32 %v682, 65535
  %v706 = vshrl.u32 %v682, 16
  %v707 = vand.u32 %v677, 65535
  %v708 = vshrl.u32 %v677, 16
  %v709 = vmul.u32 %v705, %v707
  %v710 = vmul.u32 %v705, %v708
  %v711 = vmul.u32 %v706, %v707
  %v712 = vmul.u32 %v706, %v708
  %v713 = vshll.u32 %v710, 16
  %v714 = vshrl.u32 %v710, 16
  %v715 = vshll.u32 %v711, 16
  %v716 = vshrl.u32 %v711, 16
  %vm717 = vc.u32 %v709, %v713
  %v718 = vsel %vm717, 1, 0
  %v719 = vadd.s32 %v709, %v713
  %v720 = vadd.s32 %v712, %v718
  %vm721 = vc.u32 %v719, %v715
  %v722 = vsel %vm721, 1, 0
  %v723 = vadd.s32 %v719, %v715
  %v724 = vadd.s32 %v720, %v722
  %v725 = vadd.s32 %v724, %v714
  %v726 = vadd.s32 %v725, %v716
  %v727 = vmul.u32 %v682, %v673
  %v728 = vadd.s32 %v704, %v723
  %vm729 = vc.u32 %v704, %v723
  %v730 = vadd.s32 %v726, 1
  %v731 = vsel %vm729, %v730, %v726
  %v732 = vadd.s32 %v727, %v731
  %v733 = vadd.s32 %v732, 536870912
  %v734 = vshrl.u32 %v733, 30
  %v735 = vshll.u32 %v734, 30
  %v736 = vsub.s32 %v732, %v735
  %vm737 = vcmp.lt.s32.totalorder %v736, 0
  %v738 = vsub.s32 0, %v736
  %v739 = vsel %vm737, %v738, %v736
  %v740 = vclz %v739
  %v741 = vsub.s32 %v740, 2
  %vm742 = vcmp.gt.s32.totalorder 0, %v741
  %v743 = vsel %vm742, 0, %v741
  %v744 = vsub.s32 32, %v743
  %v745 = vshll.u32 %v736, %v743
  %v746 = vshrl.u32 %v728, %v744
  %v747 = vor.u32 %v745, %v746
  %v748 = vsub.s32 4294967266, %v743
  %v749 = vadd.s32 %v748, 127
  %v750 = vshll.u32 %v749, 23
  %v751 = vor.u32 4788187, %v750
  %v752 = vand.u32 2147483647, %v751
  %v754 = vcvt.s32.f32 %v747
  %v755 = vmul.f32 %v754, %v752
  %v756 = vxor.u32 %v755, 2147483648
  %v757 = vsel %vm636, %v756, %v755
  %v758 = vsub.s32 4, %v734
  %v759 = vsel %vm636, %v758, %v734
  %v760 = vsel %vm635, %v15, %v757
  %v761 = vsel %vm635, 0, %v759
  %v762 = vmul.f32 %v760, %v760
  %v763 = vmul.f32 %v762, -0.001358992
  %v764 = vadd.f32 %v763, 0.041655596
  %v765 = vmul.f32 %v762, %v764
  %v766 = vadd.f32 %v765, -0.4999988
  %v767 = vmul.f32 %v762, %v766
  %v768 = vadd.f32 1.0, %v767
  %v769 = vmul.f32 %v760, %v760
  %v770 = vmul.f32 %v769, -0.00019511016
  %v771 = vadd.f32 %v770, 0.008332121
  %v772 = vmul.f32 %v769, %v771
  %v773 = vadd.f32 %v772, -0.16666654
  %v774 = vmul.f32 %v769, %v773
  %v775 = vadd.f32 %v774, 1.0
  %v776 = vmul.f32 %v775, %v760
  %vm777 = vweird.f32 %v15
  %v778 = vand.u32 %v761, 3
  %vm779 = vcmp.lt.s32.totalorder %v778, 2
  %vm780 = vcmp.eq.s32.totalorder %v778, 0
  %v781 = vxor.u32 %v776, 2147483648
  %v782 = vsel %vm780, %v768, %v781
  %vm783 = vcmp.eq.s32.totalorder %v778, 2
  %v784 = vxor.u32 %v768, 2147483648
  %v785 = vsel %vm783, %v784, %v776
  %v786 = vsel %vm779, %v782, %v785
  %v787 = vsel %vm777, nan, %v786
  %v788 = vand.u32 2147483647, %v15
  %vm789 = vcmp.le.f32.partialorder %v788, 0.7853982
  %vm790 = vcmp.lt.s32.totalorder %v15, 0
  %v791 = vand.u32 %v15, 2139095040
  %v792 = vshrl.u32 %v791, 23
  %v793 = vsub.s32 %v792, 127
  %v794 = vand.u32 2147483647, %v15
  %v795 = vand.u32 %v794, 8388607
  %v796 = vor.u32 %v795, 8388608
  %v797 = vsub.s32 0, %v796
  %v798 = vadd.s32 %v793, 1
  %vm799 = vcmp.gt.s32.totalorder %v798, 0
  %v800 = vsel %vm799, %v798, 0
  %v801 = vshrl.u32 %v800, 5
  %v802 = vand.u32 %v800, 31
  %v803 = vsub.s32 32, %v802
  %v804 = vshrl.u32 683565275, %v803
  %v805 = vshll.u32 683565275, %v802
  %v806 = vshrl.u32 2475754826, %v803
  %v807 = vor.u32 %v805, %v806
  %v808 = vshll.u32 2475754826, %v802
  %v809 = vshrl.u32 2131351028, %v803
  %v810 = vor.u32 %v808, %v809
  %v811 = vshll.u32 2131351028, %v802
  %v812 = vshrl.u32 2102212464, %v803
  %v813 = vor.u32 %v811, %v812
  %v814 = vshll.u32 2102212464, %v802
  %v815 = vshrl.u32 920167782, %v803
  %v816 = vor.u32 %v814, %v815
  %v817 = vshll.u32 920167782, %v802
  %v818 = vshrl.u32 1326507024, %v803
  %v819 = vor.u32 %v817, %v818
  %vm820 = vcmp.lt.s32.totalorder %v801, 1
  %vm821 = vcmp.lt.s32.totalorder %v801, 2
  %vm822 = vcmp.lt.s32.totalorder %v801, 3
  %vm823 = vcmp.lt.s32.totalorder %v801, 4
  %v824 = vsel %vm820, %v804, %v807
  %v825 = vsel %vm823, %v813, 2102212464
  %v826 = vsel %vm822, %v810, %v825
  %v827 = vsel %vm821, %v824, %v826
  %v828 = vsel %vm820, %v807, %v810
  %v829 = vsel %vm823, %v816, 920167782
  %v830 = vsel %vm822, %v813, %v829
  %v831 = vsel %vm821, %v828, %v830
  %v832 = vsel %vm820, %v810, %v813
  %v833 = vsel %vm823, %v819, 1326507024
  %v834 = vsel %vm822, %v816, %v833
  %v835 = vsel %vm821, %v832, %v834
  %v836 = vshll.u32 %v796, 8
  %v837 = vand.u32 %v836, 65535
  %v838 = vshrl.u32 %v836, 16
  %v839 = vand.u32 %v835, 65535
  %v840 = vshrl.u32 %v835, 16
  %v841 = vmul.u32 %v837, %v839
  %v842 = vmul.u32 %v837, %v840
  %v843 = vmul.u32 %v838, %v839
  %v844 = vmul.u32 %v838, %v840
  %v845 = vshll.u32 %v842, 16
  %v846 = vshrl.u32 %v842, 16
  %v847 = vshll.u32 %v843, 16
  %v848 = vshrl.u32 %v843, 16
  %vm849 = vc.u32 %v841, %v845
  %v850 = vsel %vm849, 1, 0
  %v851 = vadd.s32 %v841, %v845
  %v852 = vadd.s32 %v844, %v850
  %vm853 = vc.u32 %v851, %v847
  %v854 = vsel %vm853, 1, 0
  %v855 = vadd.s32 %v851, %v847
  %v856 = vadd.s32 %v852, %v854
  %v857 = vadd.s32 %v856, %v846
  %v858 = vadd.s32 %v857, %v848
  %v859 = vand.u32 %v836, 65535
  %v860 = vshrl.u32 %v836, 16
  %v861 = vand.u32 %v831, 65535
  %v862 = vshrl.u32 %v831, 16
  %v863 = vmul.u32 %v859, %v861
  %v864 = vmul.u32 %v859, %v862
  %v865 = vmul.u32 %v860, %v861
  %v866 = vmul.u32 %v860, %v862
  %v867 = vshll.u32 %v864, 16
  %v868 = vshrl.u32 %v864, 16
  %v869 = vshll.u32 %v865, 16
  %v870 = vshrl.u32 %v865, 16
  %vm871 = vc.u32 %v863, %v867
  %v872 = vsel %vm871, 1, 0
  %v873 = vadd.s32 %v863, %v867
  %v874 = vadd.s32 %v866, %v872
  %vm875 = vc.u32 %v873, %v869
  %v876 = vsel %vm875, 1, 0
  %v877 = vadd.s32 %v873, %v869
  %v878 = vadd.s32 %v874, %v876
  %v879 = vadd.s32 %v878, %v868
  %v880 = vadd.s32 %v879, %v870
  %v881 = vmul.u32 %v836, %v827
  %v882 = vadd.s32 %v858, %v877
  %vm883 = vc.u32 %v858, %v877
  %v884 = vadd.s32 %v880, 1
  %v885 = vsel %vm883, %v884, %v880
  %v886 = vadd.s32 %v881, %v885
  %v887 = vadd.s32 %v886, 536870912
  %v888 = vshrl.u32 %v887, 30
  %v889 = vshll.u32 %v888, 30
  %v890 = vsub.s32 %v886, %v889
  %vm891 = vcmp.lt.s32.totalorder %v890, 0
  %v892 = vsub.s32 0, %v890
  %v893 = vsel %vm891, %v892, %v890
  %v894 = vclz %v893
  %v895 = vsub.s32 %v894, 2
  %vm896 = vcmp.gt.s32.totalorder 0, %v895
  %v897 = vsel %vm896, 0, %v895
  %v898 = vsub.s32 32, %v897
  %v899 = vshll.u32 %v890, %v897
  %v900 = vshrl.u32 %v882, %v898
  %v901 = vor.u32 %v899, %v900
  %v902 = vsub.s32 4294967266, %v897
  %v903 = vadd.s32 %v902, 127
  %v904 = vshll.u32 %v903, 23
  %v905 = vor.u32 4788187, %v904
  %v906 = vand.u32 2147483647, %v905
  %v908 = vcvt.s32.f32 %v901
  %v909 = vmul.f32 %v908, %v906
  %v910 = vxor.u32 %v909, 2147483648
  %v911 = vsel %vm790, %v910, %v909
  %v912 = vsub.s32 4, %v888
  %v913 = vsel %vm790, %v912, %v888
  %v914 = vsel %vm789, %v15, %v911
  %v915 = vsel %vm789, 0, %v913
  %v916 = vmul.f32 %v914, %v914
  %v917 = vmul.f32 %v916, -0.001358992
  %v918 = vadd.f32 %v917, 0.041655596
  %v919 = vmul.f32 %v916, %v918
  %v920 = vadd.f32 %v919, -0.4999988
  %v921 = vmul.f32 %v916, %v920
  %v922 = vadd.f32 1.0, %v921
  %v923 = vmul.f32 %v914, %v914
  %v924 = vmul.f32 %v923, -0.00019511016
  %v925 = vadd.f32 %v924, 0.008332121
  %v926 = vmul.f32 %v923, %v925
  %v927 = vadd.f32 %v926, -0.16666654
  %v928 = vmul.f32 %v923, %v927
  %v929 = vadd.f32 %v928, 1.0
  %v930 = vmul.f32 %v929, %v914
  %vm931 = vweird.f32 %v15
  %v932 = vadd.s32 %v915, 3
  %v933 = vand.u32 %v932, 3
  %vm934 = vcmp.lt.s32.totalorder %v933, 2
  %vm935 = vcmp.eq.s32.totalorder %v933, 0
  %v936 = vxor.u32 %v930, 2147483648
  %v937 = vsel %vm935, %v922, %v936
  %vm938 = vcmp.eq.s32.totalorder %v933, 2
  %v939 = vxor.u32 %v922, 2147483648
  %v940 = vsel %vm938, %v939, %v930
  %v941 = vsel %vm934, %v937, %v940
  %v942 = vsel %vm931, nan, %v941
  %v943 = vmul.f32 %v479, %v169
  %v944 = vmul.f32 %v633, %v169
  %v945 = vmul.f32 %v479, %v324
  %v946 = vmul.f32 %v633, %v324
  %v947 = vmul.f32 %v787, %v943
  %v948 = vmul.f32 %v942, %v946
  %v949 = vsub.f32 %v947, %v948
  %950 = vst [vmem:[%s1] sm:$0x1] %v949
  %v951 = vmul.f32 %v787, %v944
  %v952 = vmul.f32 %v942, %v945
  %v953 = vsub.f32 %v951, %v952
  %s954 = scalar_lea.vmem %s1, 1
  %955 = vst [vmem:[%s954] sm:$0x1] %v953
  %v956 = vmul.f32 %v787, %v945
  %v957 = vmul.f32 %v942, %v944
  %v958 = vadd.f32 %v956, %v957
  %s959 = scalar_lea.vmem %s1, 2
  %960 = vst [vmem:[%s959] sm:$0x1] %v958
  %v961 = vmul.f32 %v787, %v946
  %v962 = vmul.f32 %v942, %v943
  %v963 = vadd.f32 %v961, %v962
  %s964 = scalar_lea.vmem %s1, 3
  %965 = vst [vmem:[%s964] sm:$0x1] %v963
  // Predicated region
  $region6: #{quat_predictor_az_ele.1} parent=0 // pred_check
    _
  $region7: #{quat_predictor_az_ele.1} parent=0 // pred_check_branch
    %967 = sbr.rel (0) target = $region9
  $region8: #{quat_predictor_az_ele.1} parent=0 // pred_region
    _
  $region9: #{quat_predictor_az_ele.1} parent=0 // pred_fallthru
    _
  // Predicated region
  $region10: #{quat_predictor_az_ele.1} parent=0 // pred_check
    _
  $region11: #{quat_predictor_az_ele.1} parent=0 // pred_check_branch
    %969 = sbr.rel (0) target = $region13
  $region12: #{quat_predictor_az_ele.1} parent=0 // pred_region
    _
  $region13: #{quat_predictor_az_ele.1} parent=0 // pred_fallthru
    _

</llo_original>
